<compile_context>
chip_gen: v7x
topology: tpu7x:2x2x1
jax: 0.10.0
libtpu: 0.0.40
codegen_flags: <defaults>
</compile_context>

<pallas_src>
import math
import numpy as np
import jax
import jax.numpy as jnp
from jax.experimental import pallas as pl
from jax.experimental.pallas import tpu as pltpu


def _round_up(x, m):
    return -(-x // m) * m


def dice_loss_forward(logits, target_labels, *,
                      block_budget_bytes=8 * 1024 * 1024, eps=1e-6):
    """Mirrors _AbstractDiceLoss.forward (weight=None, sigmoid_normalization=True,
    skip_index_after=None).  Returns (loss, per_channel_dice)."""
    B, C, D, H, W = logits.shape
    assert target_labels.shape == (B, D, H, W)
    DHW = D * H * W

    # Stream native dtypes: bf16/f32 logits as-is, any integer labels as-is
    # (no wrapper cast pass); float labels mimic torch `.long()`.
    if logits.dtype not in (jnp.float32, jnp.bfloat16):
        logits = logits.astype(jnp.float32)
    if not jnp.issubdtype(target_labels.dtype, jnp.integer):
        target_labels = target_labels.astype(jnp.int32)

    x = logits.reshape(B, C, DHW)            # free reshape of contiguous NCDHW
    labels = target_labels.reshape(B, DHW)

    pad = (-DHW) % 128
    if pad:
        # TODO(synk): non-128-aligned volumes pay one extra HBM pass for this pad
        # copy; an in-kernel ragged-lane mask would avoid it.
        # Pad logits with -80: sigmoid(-80) ~ 1.8e-35 (finite, no inf/nan) and
        # p*p underflows to 0; padded labels == C so they never match a class.
        x = jnp.pad(x, ((0, 0), (0, 0), (0, pad)), constant_values=-80.0)
        labels = jnp.pad(labels, ((0, 0), (0, pad)), constant_values=C)
    S = (DHW + pad) // 128

    x4 = x.reshape(B, C, S, 128)             # free reshapes
    lab4 = labels.reshape(B, 1, S, 128)

    x_item = x4.dtype.itemsize
    lab_item = lab4.dtype.itemsize
    # minimal legal sublane multiple across both streamed dtypes (f32:8, bf16:16, i8:32)
    sub_mult = max(8 * 4 // x_item, 8 * 4 // lab_item)
    bytes_per_row = 128 * (C * x_item + lab_item)

    max_tile_s = max(sub_mult,
                     (block_budget_bytes // bytes_per_row) // sub_mult * sub_mult)
    tile_s = S if S <= max_tile_s else max_tile_s

    # v7x megacore: with B == 1 the batch axis alone leaves a TensorCore idle,
    # so split S into two outer "parallel" chunks (no effect on v5e/v6e perf).
    n_split = 1
    if B == 1 and S > sub_mult:
        half = min(_round_up(-(-S // 2), sub_mult), max_tile_s)
        tile_s = min(tile_s, max(half, sub_mult))
        if -(-S // tile_s) >= 2:
            n_split = 2

    total_blocks = -(-S // tile_s)           # cdiv
    bps = -(-total_blocks // n_split)        # inner grid extent per split
    n_outer = B * n_split
    needs_mask = (n_split * bps * tile_s) > S   # static: any partial/empty tile?
    acc_rows = math.gcd(tile_s, 8)           # sublane-resident accumulator rows

    def kernel(x_ref, lab_ref, inter_ref, pden_ref, tden_ref):
        @pl.when(pl.program_id(1) == 0)
        def _init():
            inter_ref[...] = jnp.zeros_like(inter_ref)
            pden_ref[...] = jnp.zeros_like(pden_ref)
            tden_ref[...] = jnp.zeros_like(tden_ref)

        lab = lab_ref[0].astype(jnp.int32)                    # (tile_s, 128)

        if needs_mask:
            split = (pl.program_id(0) % n_split) if n_split > 1 else 0
            blk = split * bps + pl.program_id(1)
            valid = S - blk * tile_s                          # <= 0 for empty tiles
            rows = jax.lax.broadcasted_iota(jnp.int32, (tile_s, 128), 0)
            m = rows < valid
        else:
            m = None

        def rowsum(v):                        # (tile_s,128) -> (acc_rows,128), VALU adds
            return v.reshape(tile_s // acc_rows, acc_rows, 128).sum(axis=0)

        for c in range(C):
            xc = x_ref[c].astype(jnp.float32)
            # sigmoid = rcp(1 + exp(-x)): one EUP transcendental + approx reciprocal
            p = pl.reciprocal(1.0 + jnp.exp(-xc), approx=True)
            tb = lab == c                     # one-hot channel mask, reused twice
            if m is not None:
                p = jnp.where(m, p, 0.0)
                tb = jnp.logical_and(tb, m)
            t = tb.astype(jnp.float32)
            inter_ref[c] += rowsum(p * t)
            pden_ref[c] += rowsum(p * p)
            tden_ref[c] += rowsum(t)          # t^2 == t

    if n_split == 1:
        in_map = lambda o, i: (o, 0, i, 0)
    else:
        def in_map(o, i):
            blk = (o % n_split) * bps + i
            blk = jnp.minimum(blk, total_blocks - 1)   # keep empty-tile DMAs in bounds
            return (o // n_split, 0, blk, 0)
    out_map = lambda o, i: (o, 0, 0, 0)

    out_sds = jax.ShapeDtypeStruct((n_outer, C, acc_rows, 128), jnp.float32)
    in_block_bytes = tile_s * 128 * (C * x_item + lab_item)
    out_block_bytes = 3 * C * acc_rows * 128 * 4
    vmem_limit = int(2 * (in_block_bytes + out_block_bytes) + (4 << 20))

    inter_p, pden_p, tden_p = pl.pallas_call(
        kernel,
        out_shape=(out_sds, out_sds, out_sds),
        grid_spec=pltpu.PrefetchScalarGridSpec(
            num_scalar_prefetch=0,
            grid=(n_outer, bps),
            in_specs=[
                pl.BlockSpec((None, C, tile_s, 128), in_map),
                pl.BlockSpec((None, 1, tile_s, 128), in_map),
            ],
            out_specs=[
                pl.BlockSpec((None, C, acc_rows, 128), out_map),
                pl.BlockSpec((None, C, acc_rows, 128), out_map),
                pl.BlockSpec((None, C, acc_rows, 128), out_map),
            ],
        ),
        compiler_params=pltpu.CompilerParams(
            dimension_semantics=("parallel", "arbitrary"),
            vmem_limit_bytes=vmem_limit),
    )(x4, lab4)

    # tiny final combine: outer (batch*split) + sublane + lane reduce, then dice
    inter = jnp.sum(inter_p, axis=(0, 2, 3))
    pden = jnp.sum(pden_p, axis=(0, 2, 3))
    tden = jnp.sum(tden_p, axis=(0, 2, 3))
    per_channel = 2.0 * inter / jnp.maximum(pden + tden, eps)
    loss = 1.0 - jnp.mean(per_channel)
    return loss, per_channel


def _reference(logits, labels, eps=1e-6):
    """Pure-JAX mirror of the torch forward (sigmoid + one-hot + per-channel dice)."""
    B, C = logits.shape[0], logits.shape[1]
    p = jax.nn.sigmoid(logits.astype(jnp.float32))
    onehot = jax.nn.one_hot(labels.astype(jnp.int32), C, dtype=jnp.float32)
    onehot = jnp.moveaxis(onehot, -1, 1)                 # (B,C,D,H,W)
    pf = p.reshape(B, C, -1)
    tf = onehot.reshape(B, C, -1)
    inter = jnp.sum(pf * tf, axis=(0, 2))
    denom = jnp.maximum(jnp.sum(pf * pf, axis=(0, 2)) +
                        jnp.sum(tf * tf, axis=(0, 2)), eps)
    dice = 2.0 * inter / denom
    return 1.0 - jnp.mean(dice), dice


if __name__ == "__main__":
    key = jax.random.PRNGKey(0)

    configs = [
        # primary shape from the module spec
        dict(B=2, C=4, D=8, H=8, W=8, xdt=jnp.float32, ldt=jnp.int32, kw={}),
        # non-128-aligned volume (pad path) + int8 labels
        dict(B=2, C=2, D=5, H=5, W=5, xdt=jnp.float32, ldt=jnp.int8, kw={}),
        # forced multi-tile + ragged-tail mask + B==1 S-split (small block budget)
        dict(B=1, C=3, D=8, H=16, W=24, xdt=jnp.float32, ldt=jnp.int32,
             kw=dict(block_budget_bytes=17_000)),
        # bf16 logit streaming
        dict(B=1, C=4, D=8, H=8, W=8, xdt=jnp.bfloat16, ldt=jnp.int32, kw={}),
    ]

    for cfg in configs:
        key, k1, k2 = jax.random.split(key, 3)
        shape = (cfg["B"], cfg["C"], cfg["D"], cfg["H"], cfg["W"])
        logits = jax.random.normal(k1, shape, dtype=jnp.float32).astype(cfg["xdt"])
        labels = jax.random.randint(
            k2, (cfg["B"], cfg["D"], cfg["H"], cfg["W"]), 0, cfg["C"],
            dtype=jnp.int32).astype(cfg["ldt"])

        loss, dice = dice_loss_forward(logits, labels, **cfg["kw"])
        loss = jax.block_until_ready(loss)
        dice = np.asarray(jax.block_until_ready(dice))

        ref_loss, ref_dice = _reference(logits, labels)
        # tolerance accounts for the approx-reciprocal (EUP) sigmoid
        np.testing.assert_allclose(dice, np.asarray(ref_dice), rtol=2e-3, atol=2e-3)
        np.testing.assert_allclose(float(loss), float(ref_loss), rtol=2e-3, atol=2e-3)

    print("KERNEL_OK")
</pallas_src>

<mosaic_0001>
module attributes {stable_mosaic.version = 11 : i64} {
  func.func @kernel(%arg0: i32, %arg1: i32, %arg2: memref<1x4x4x128xf32, #tpu.memory_space<vmem>>, %arg3: memref<1x1x4x128xi32, #tpu.memory_space<vmem>>, %arg4: memref<1x4x4x128xf32, #tpu.memory_space<vmem>>, %arg5: memref<1x4x4x128xf32, #tpu.memory_space<vmem>>, %arg6: memref<1x4x4x128xf32, #tpu.memory_space<vmem>>) attributes {dimension_semantics = [#tpu.dimension_semantics<parallel>, #tpu.dimension_semantics<arbitrary>], iteration_bounds = array<i64: 2, 1>, scalar_prefetch = 0 : i64, scratch_operands = 0 : i64, tpu.core_type = #tpu.core_type<tc>, window_params = [{transform_indices = @transform_0, window_bounds = array<i64: 1, 4, 4, 128>}, {transform_indices = @transform_1, window_bounds = array<i64: 1, 1, 4, 128>}, {transform_indices = @transform_2, window_bounds = array<i64: 1, 4, 4, 128>}, {transform_indices = @transform_3, window_bounds = array<i64: 1, 4, 4, 128>}, {transform_indices = @transform_4, window_bounds = array<i64: 1, 4, 4, 128>}]} {
    %c0_i32 = arith.constant 0 : i32
    %0 = arith.cmpi eq, %arg1, %c0_i32 : i32
    %1 = arith.extui %0 : i1 to i32
    %c0_i32_0 = arith.constant 0 : i32
    %2 = arith.cmpi ne, %1, %c0_i32_0 : i32
    scf.if %2 {
      %cst_133 = arith.constant 0.000000e+00 : f32
      %157 = vector.broadcast %cst_133 : f32 to vector<4x4x128xf32>
      %c0_134 = arith.constant 0 : index
      %c0_135 = arith.constant 0 : index
      %c0_136 = arith.constant 0 : index
      %c0_137 = arith.constant 0 : index
      %158 = vector.load %arg4[%c0_134, %c0_135, %c0_136, %c0_137] : memref<1x4x4x128xf32, #tpu.memory_space<vmem>>, vector<1x4x4x128xf32>
      %159 = vector.shape_cast %158 : vector<1x4x4x128xf32> to vector<4x4x128xf32>
      %160 = vector.shape_cast %157 : vector<4x4x128xf32> to vector<1x4x4x128xf32>
      tpu.vector_store %arg4[%c0_134, %c0_135, %c0_136, %c0_137], %160 {strides = array<i32>} : memref<1x4x4x128xf32, #tpu.memory_space<vmem>>, vector<1x4x4x128xf32>,
      %cst_138 = arith.constant 0.000000e+00 : f32
      %161 = vector.broadcast %cst_138 : f32 to vector<4x4x128xf32>
      %c0_139 = arith.constant 0 : index
      %c0_140 = arith.constant 0 : index
      %c0_141 = arith.constant 0 : index
      %c0_142 = arith.constant 0 : index
      %162 = vector.load %arg5[%c0_139, %c0_140, %c0_141, %c0_142] : memref<1x4x4x128xf32, #tpu.memory_space<vmem>>, vector<1x4x4x128xf32>
      %163 = vector.shape_cast %162 : vector<1x4x4x128xf32> to vector<4x4x128xf32>
      %164 = vector.shape_cast %161 : vector<4x4x128xf32> to vector<1x4x4x128xf32>
      tpu.vector_store %arg5[%c0_139, %c0_140, %c0_141, %c0_142], %164 {strides = array<i32>} : memref<1x4x4x128xf32, #tpu.memory_space<vmem>>, vector<1x4x4x128xf32>,
      %cst_143 = arith.constant 0.000000e+00 : f32
      %165 = vector.broadcast %cst_143 : f32 to vector<4x4x128xf32>
      %c0_144 = arith.constant 0 : index
      %c0_145 = arith.constant 0 : index
      %c0_146 = arith.constant 0 : index
      %c0_147 = arith.constant 0 : index
      %166 = vector.load %arg6[%c0_144, %c0_145, %c0_146, %c0_147] : memref<1x4x4x128xf32, #tpu.memory_space<vmem>>, vector<1x4x4x128xf32>
      %167 = vector.shape_cast %166 : vector<1x4x4x128xf32> to vector<4x4x128xf32>
      %168 = vector.shape_cast %165 : vector<4x4x128xf32> to vector<1x4x4x128xf32>
      tpu.vector_store %arg6[%c0_144, %c0_145, %c0_146, %c0_147], %168 {strides = array<i32>} : memref<1x4x4x128xf32, #tpu.memory_space<vmem>>, vector<1x4x4x128xf32>,
    } else {
    }
    %c0 = arith.constant 0 : index
    %c0_1 = arith.constant 0 : index
    %c0_2 = arith.constant 0 : index
    %c0_3 = arith.constant 0 : index
    %3 = vector.load %arg3[%c0, %c0_1, %c0_2, %c0_3] : memref<1x1x4x128xi32, #tpu.memory_space<vmem>>, vector<1x1x4x128xi32>
    %4 = vector.shape_cast %3 : vector<1x1x4x128xi32> to vector<4x128xi32>
    %c0_4 = arith.constant 0 : index
    %c0_5 = arith.constant 0 : index
    %c0_6 = arith.constant 0 : index
    %c0_7 = arith.constant 0 : index
    %5 = vector.load %arg2[%c0_4, %c0_5, %c0_6, %c0_7] : memref<1x4x4x128xf32, #tpu.memory_space<vmem>>, vector<1x1x4x128xf32>
    %6 = vector.shape_cast %5 : vector<1x1x4x128xf32> to vector<4x128xf32>
    %cst = arith.constant 0.000000e+00 : f32
    %7 = vector.broadcast %cst : f32 to vector<4x128xf32>
    %8 = arith.subf %7, %6 : vector<4x128xf32>
    %9 = math.exp %8 : vector<4x128xf32>
    %cst_8 = arith.constant 1.000000e+00 : f32
    %10 = vector.broadcast %cst_8 : f32 to vector<4x128xf32>
    %11 = arith.addf %10, %9 : vector<4x128xf32>
    %12 = tpu.reciprocal %11 {approx = true} : vector<4x128xf32> -> vector<4x128xf32>
    %c0_i32_9 = arith.constant 0 : i32
    %13 = vector.broadcast %c0_i32_9 : i32 to vector<4x128xi32>
    %14 = arith.cmpi eq, %4, %13 : vector<4x128xi32>
    %15 = arith.extui %14 : vector<4x128xi1> to vector<4x128xi32>
    %16 = arith.sitofp %15 : vector<4x128xi32> to vector<4x128xf32>
    %c0_10 = arith.constant 0 : index
    %c0_11 = arith.constant 0 : index
    %c0_12 = arith.constant 0 : index
    %c0_13 = arith.constant 0 : index
    %17 = vector.load %arg4[%c0_10, %c0_11, %c0_12, %c0_13] : memref<1x4x4x128xf32, #tpu.memory_space<vmem>>, vector<1x1x4x128xf32>
    %18 = vector.shape_cast %17 : vector<1x1x4x128xf32> to vector<4x128xf32>
    %19 = arith.mulf %12, %16 : vector<4x128xf32>
    %20 = vector.shape_cast %19 : vector<4x128xf32> to vector<1x4x128xf32>
    %cst_14 = arith.constant dense<0.000000e+00> : vector<4x128xf32>
    %21 = vector.multi_reduction <add>, %20, %cst_14 [0] : vector<1x4x128xf32> to vector<4x128xf32>
    %22 = arith.addf %18, %21 : vector<4x128xf32>
    %c0_15 = arith.constant 0 : index
    %c0_16 = arith.constant 0 : index
    %c0_17 = arith.constant 0 : index
    %c0_18 = arith.constant 0 : index
    %23 = vector.load %arg4[%c0_15, %c0_16, %c0_17, %c0_18] : memref<1x4x4x128xf32, #tpu.memory_space<vmem>>, vector<1x1x4x128xf32>
    %24 = vector.shape_cast %23 : vector<1x1x4x128xf32> to vector<4x128xf32>
    %25 = vector.shape_cast %22 : vector<4x128xf32> to vector<1x1x4x128xf32>
    tpu.vector_store %arg4[%c0_15, %c0_16, %c0_17, %c0_18], %25 {strides = array<i32>} : memref<1x4x4x128xf32, #tpu.memory_space<vmem>>, vector<1x1x4x128xf32>,
    %c0_19 = arith.constant 0 : index
    %c0_20 = arith.constant 0 : index
    %c0_21 = arith.constant 0 : index
    %c0_22 = arith.constant 0 : index
    %26 = vector.load %arg5[%c0_19, %c0_20, %c0_21, %c0_22] : memref<1x4x4x128xf32, #tpu.memory_space<vmem>>, vector<1x1x4x128xf32>
    %27 = vector.shape_cast %26 : vector<1x1x4x128xf32> to vector<4x128xf32>
    %28 = arith.mulf %12, %12 : vector<4x128xf32>
    %29 = vector.shape_cast %28 : vector<4x128xf32> to vector<1x4x128xf32>
    %cst_23 = arith.constant dense<0.000000e+00> : vector<4x128xf32>
    %30 = vector.multi_reduction <add>, %29, %cst_23 [0] : vector<1x4x128xf32> to vector<4x128xf32>
    %31 = arith.addf %27, %30 : vector<4x128xf32>
    %c0_24 = arith.constant 0 : index
    %c0_25 = arith.constant 0 : index
    %c0_26 = arith.constant 0 : index
    %c0_27 = arith.constant 0 : index
    %32 = vector.load %arg5[%c0_24, %c0_25, %c0_26, %c0_27] : memref<1x4x4x128xf32, #tpu.memory_space<vmem>>, vector<1x1x4x128xf32>
    %33 = vector.shape_cast %32 : vector<1x1x4x128xf32> to vector<4x128xf32>
    %34 = vector.shape_cast %31 : vector<4x128xf32> to vector<1x1x4x128xf32>
    tpu.vector_store %arg5[%c0_24, %c0_25, %c0_26, %c0_27], %34 {strides = array<i32>} : memref<1x4x4x128xf32, #tpu.memory_space<vmem>>, vector<1x1x4x128xf32>,
    %c0_28 = arith.constant 0 : index
    %c0_29 = arith.constant 0 : index
    %c0_30 = arith.constant 0 : index
    %c0_31 = arith.constant 0 : index
    %35 = vector.load %arg6[%c0_28, %c0_29, %c0_30, %c0_31] : memref<1x4x4x128xf32, #tpu.memory_space<vmem>>, vector<1x1x4x128xf32>
    %36 = vector.shape_cast %35 : vector<1x1x4x128xf32> to vector<4x128xf32>
    %37 = vector.shape_cast %16 : vector<4x128xf32> to vector<1x4x128xf32>
    %cst_32 = arith.constant dense<0.000000e+00> : vector<4x128xf32>
    %38 = vector.multi_reduction <add>, %37, %cst_32 [0] : vector<1x4x128xf32> to vector<4x128xf32>
    %39 = arith.addf %36, %38 : vector<4x128xf32>
    %c0_33 = arith.constant 0 : index
    %c0_34 = arith.constant 0 : index
    %c0_35 = arith.constant 0 : index
    %c0_36 = arith.constant 0 : index
    %40 = vector.load %arg6[%c0_33, %c0_34, %c0_35, %c0_36] : memref<1x4x4x128xf32, #tpu.memory_space<vmem>>, vector<1x1x4x128xf32>
    %41 = vector.shape_cast %40 : vector<1x1x4x128xf32> to vector<4x128xf32>
    %42 = vector.shape_cast %39 : vector<4x128xf32> to vector<1x1x4x128xf32>
    tpu.vector_store %arg6[%c0_33, %c0_34, %c0_35, %c0_36], %42 {strides = array<i32>} : memref<1x4x4x128xf32, #tpu.memory_space<vmem>>, vector<1x1x4x128xf32>,
    %c0_37 = arith.constant 0 : index
    %c1 = arith.constant 1 : index
    %c0_38 = arith.constant 0 : index
    %c0_39 = arith.constant 0 : index
    %43 = vector.load %arg2[%c0_37, %c1, %c0_38, %c0_39] : memref<1x4x4x128xf32, #tpu.memory_space<vmem>>, vector<1x1x4x128xf32>
    %44 = vector.shape_cast %43 : vector<1x1x4x128xf32> to vector<4x128xf32>
    %cst_40 = arith.constant 0.000000e+00 : f32
    %45 = vector.broadcast %cst_40 : f32 to vector<4x128xf32>
    %46 = arith.subf %45, %44 : vector<4x128xf32>
    %47 = math.exp %46 : vector<4x128xf32>
    %cst_41 = arith.constant 1.000000e+00 : f32
    %48 = vector.broadcast %cst_41 : f32 to vector<4x128xf32>
    %49 = arith.addf %48, %47 : vector<4x128xf32>
    %50 = tpu.reciprocal %49 {approx = true} : vector<4x128xf32> -> vector<4x128xf32>
    %c1_i32 = arith.constant 1 : i32
    %51 = vector.broadcast %c1_i32 : i32 to vector<4x128xi32>
    %52 = arith.cmpi eq, %4, %51 : vector<4x128xi32>
    %53 = arith.extui %52 : vector<4x128xi1> to vector<4x128xi32>
    %54 = arith.sitofp %53 : vector<4x128xi32> to vector<4x128xf32>
    %c0_42 = arith.constant 0 : index
    %c1_43 = arith.constant 1 : index
    %c0_44 = arith.constant 0 : index
    %c0_45 = arith.constant 0 : index
    %55 = vector.load %arg4[%c0_42, %c1_43, %c0_44, %c0_45] : memref<1x4x4x128xf32, #tpu.memory_space<vmem>>, vector<1x1x4x128xf32>
    %56 = vector.shape_cast %55 : vector<1x1x4x128xf32> to vector<4x128xf32>
    %57 = arith.mulf %50, %54 : vector<4x128xf32>
    %58 = vector.shape_cast %57 : vector<4x128xf32> to vector<1x4x128xf32>
    %cst_46 = arith.constant dense<0.000000e+00> : vector<4x128xf32>
    %59 = vector.multi_reduction <add>, %58, %cst_46 [0] : vector<1x4x128xf32> to vector<4x128xf32>
    %60 = arith.addf %56, %59 : vector<4x128xf32>
    %c0_47 = arith.constant 0 : index
    %c1_48 = arith.constant 1 : index
    %c0_49 = arith.constant 0 : index
    %c0_50 = arith.constant 0 : index
    %61 = vector.load %arg4[%c0_47, %c1_48, %c0_49, %c0_50] : memref<1x4x4x128xf32, #tpu.memory_space<vmem>>, vector<1x1x4x128xf32>
    %62 = vector.shape_cast %61 : vector<1x1x4x128xf32> to vector<4x128xf32>
    %63 = vector.shape_cast %60 : vector<4x128xf32> to vector<1x1x4x128xf32>
    tpu.vector_store %arg4[%c0_47, %c1_48, %c0_49, %c0_50], %63 {strides = array<i32>} : memref<1x4x4x128xf32, #tpu.memory_space<vmem>>, vector<1x1x4x128xf32>,
    %c0_51 = arith.constant 0 : index
    %c1_52 = arith.constant 1 : index
    %c0_53 = arith.constant 0 : index
    %c0_54 = arith.constant 0 : index
    %64 = vector.load %arg5[%c0_51, %c1_52, %c0_53, %c0_54] : memref<1x4x4x128xf32, #tpu.memory_space<vmem>>, vector<1x1x4x128xf32>
    %65 = vector.shape_cast %64 : vector<1x1x4x128xf32> to vector<4x128xf32>
    %66 = arith.mulf %50, %50 : vector<4x128xf32>
    %67 = vector.shape_cast %66 : vector<4x128xf32> to vector<1x4x128xf32>
    %cst_55 = arith.constant dense<0.000000e+00> : vector<4x128xf32>
    %68 = vector.multi_reduction <add>, %67, %cst_55 [0] : vector<1x4x128xf32> to vector<4x128xf32>
    %69 = arith.addf %65, %68 : vector<4x128xf32>
    %c0_56 = arith.constant 0 : index
    %c1_57 = arith.constant 1 : index
    %c0_58 = arith.constant 0 : index
    %c0_59 = arith.constant 0 : index
    %70 = vector.load %arg5[%c0_56, %c1_57, %c0_58, %c0_59] : memref<1x4x4x128xf32, #tpu.memory_space<vmem>>, vector<1x1x4x128xf32>
    %71 = vector.shape_cast %70 : vector<1x1x4x128xf32> to vector<4x128xf32>
    %72 = vector.shape_cast %69 : vector<4x128xf32> to vector<1x1x4x128xf32>
    tpu.vector_store %arg5[%c0_56, %c1_57, %c0_58, %c0_59], %72 {strides = array<i32>} : memref<1x4x4x128xf32, #tpu.memory_space<vmem>>, vector<1x1x4x128xf32>,
    %c0_60 = arith.constant 0 : index
    %c1_61 = arith.constant 1 : index
    %c0_62 = arith.constant 0 : index
    %c0_63 = arith.constant 0 : index
    %73 = vector.load %arg6[%c0_60, %c1_61, %c0_62, %c0_63] : memref<1x4x4x128xf32, #tpu.memory_space<vmem>>, vector<1x1x4x128xf32>
    %74 = vector.shape_cast %73 : vector<1x1x4x128xf32> to vector<4x128xf32>
    %75 = vector.shape_cast %54 : vector<4x128xf32> to vector<1x4x128xf32>
    %cst_64 = arith.constant dense<0.000000e+00> : vector<4x128xf32>
    %76 = vector.multi_reduction <add>, %75, %cst_64 [0] : vector<1x4x128xf32> to vector<4x128xf32>
    %77 = arith.addf %74, %76 : vector<4x128xf32>
    %c0_65 = arith.constant 0 : index
    %c1_66 = arith.constant 1 : index
    %c0_67 = arith.constant 0 : index
    %c0_68 = arith.constant 0 : index
    %78 = vector.load %arg6[%c0_65, %c1_66, %c0_67, %c0_68] : memref<1x4x4x128xf32, #tpu.memory_space<vmem>>, vector<1x1x4x128xf32>
    %79 = vector.shape_cast %78 : vector<1x1x4x128xf32> to vector<4x128xf32>
    %80 = vector.shape_cast %77 : vector<4x128xf32> to vector<1x1x4x128xf32>
    tpu.vector_store %arg6[%c0_65, %c1_66, %c0_67, %c0_68], %80 {strides = array<i32>} : memref<1x4x4x128xf32, #tpu.memory_space<vmem>>, vector<1x1x4x128xf32>,
    %c0_69 = arith.constant 0 : index
    %c2 = arith.constant 2 : index
    %c0_70 = arith.constant 0 : index
    %c0_71 = arith.constant 0 : index
    %81 = vector.load %arg2[%c0_69, %c2, %c0_70, %c0_71] : memref<1x4x4x128xf32, #tpu.memory_space<vmem>>, vector<1x1x4x128xf32>
    %82 = vector.shape_cast %81 : vector<1x1x4x128xf32> to vector<4x128xf32>
    %cst_72 = arith.constant 0.000000e+00 : f32
    %83 = vector.broadcast %cst_72 : f32 to vector<4x128xf32>
    %84 = arith.subf %83, %82 : vector<4x128xf32>
    %85 = math.exp %84 : vector<4x128xf32>
    %cst_73 = arith.constant 1.000000e+00 : f32
    %86 = vector.broadcast %cst_73 : f32 to vector<4x128xf32>
    %87 = arith.addf %86, %85 : vector<4x128xf32>
    %88 = tpu.reciprocal %87 {approx = true} : vector<4x128xf32> -> vector<4x128xf32>
    %c2_i32 = arith.constant 2 : i32
    %89 = vector.broadcast %c2_i32 : i32 to vector<4x128xi32>
    %90 = arith.cmpi eq, %4, %89 : vector<4x128xi32>
    %91 = arith.extui %90 : vector<4x128xi1> to vector<4x128xi32>
    %92 = arith.sitofp %91 : vector<4x128xi32> to vector<4x128xf32>
    %c0_74 = arith.constant 0 : index
    %c2_75 = arith.constant 2 : index
    %c0_76 = arith.constant 0 : index
    %c0_77 = arith.constant 0 : index
    %93 = vector.load %arg4[%c0_74, %c2_75, %c0_76, %c0_77] : memref<1x4x4x128xf32, #tpu.memory_space<vmem>>, vector<1x1x4x128xf32>
    %94 = vector.shape_cast %93 : vector<1x1x4x128xf32> to vector<4x128xf32>
    %95 = arith.mulf %88, %92 : vector<4x128xf32>
    %96 = vector.shape_cast %95 : vector<4x128xf32> to vector<1x4x128xf32>
    %cst_78 = arith.constant dense<0.000000e+00> : vector<4x128xf32>
    %97 = vector.multi_reduction <add>, %96, %cst_78 [0] : vector<1x4x128xf32> to vector<4x128xf32>
    %98 = arith.addf %94, %97 : vector<4x128xf32>
    %c0_79 = arith.constant 0 : index
    %c2_80 = arith.constant 2 : index
    %c0_81 = arith.constant 0 : index
    %c0_82 = arith.constant 0 : index
    %99 = vector.load %arg4[%c0_79, %c2_80, %c0_81, %c0_82] : memref<1x4x4x128xf32, #tpu.memory_space<vmem>>, vector<1x1x4x128xf32>
    %100 = vector.shape_cast %99 : vector<1x1x4x128xf32> to vector<4x128xf32>
    %101 = vector.shape_cast %98 : vector<4x128xf32> to vector<1x1x4x128xf32>
    tpu.vector_store %arg4[%c0_79, %c2_80, %c0_81, %c0_82], %101 {strides = array<i32>} : memref<1x4x4x128xf32, #tpu.memory_space<vmem>>, vector<1x1x4x128xf32>,
    %c0_83 = arith.constant 0 : index
    %c2_84 = arith.constant 2 : index
    %c0_85 = arith.constant 0 : index
    %c0_86 = arith.constant 0 : index
    %102 = vector.load %arg5[%c0_83, %c2_84, %c0_85, %c0_86] : memref<1x4x4x128xf32, #tpu.memory_space<vmem>>, vector<1x1x4x128xf32>
    %103 = vector.shape_cast %102 : vector<1x1x4x128xf32> to vector<4x128xf32>
    %104 = arith.mulf %88, %88 : vector<4x128xf32>
    %105 = vector.shape_cast %104 : vector<4x128xf32> to vector<1x4x128xf32>
    %cst_87 = arith.constant dense<0.000000e+00> : vector<4x128xf32>
    %106 = vector.multi_reduction <add>, %105, %cst_87 [0] : vector<1x4x128xf32> to vector<4x128xf32>
    %107 = arith.addf %103, %106 : vector<4x128xf32>
    %c0_88 = arith.constant 0 : index
    %c2_89 = arith.constant 2 : index
    %c0_90 = arith.constant 0 : index
    %c0_91 = arith.constant 0 : index
    %108 = vector.load %arg5[%c0_88, %c2_89, %c0_90, %c0_91] : memref<1x4x4x128xf32, #tpu.memory_space<vmem>>, vector<1x1x4x128xf32>
    %109 = vector.shape_cast %108 : vector<1x1x4x128xf32> to vector<4x128xf32>
    %110 = vector.shape_cast %107 : vector<4x128xf32> to vector<1x1x4x128xf32>
    tpu.vector_store %arg5[%c0_88, %c2_89, %c0_90, %c0_91], %110 {strides = array<i32>} : memref<1x4x4x128xf32, #tpu.memory_space<vmem>>, vector<1x1x4x128xf32>,
    %c0_92 = arith.constant 0 : index
    %c2_93 = arith.constant 2 : index
    %c0_94 = arith.constant 0 : index
    %c0_95 = arith.constant 0 : index
    %111 = vector.load %arg6[%c0_92, %c2_93, %c0_94, %c0_95] : memref<1x4x4x128xf32, #tpu.memory_space<vmem>>, vector<1x1x4x128xf32>
    %112 = vector.shape_cast %111 : vector<1x1x4x128xf32> to vector<4x128xf32>
    %113 = vector.shape_cast %92 : vector<4x128xf32> to vector<1x4x128xf32>
    %cst_96 = arith.constant dense<0.000000e+00> : vector<4x128xf32>
    %114 = vector.multi_reduction <add>, %113, %cst_96 [0] : vector<1x4x128xf32> to vector<4x128xf32>
    %115 = arith.addf %112, %114 : vector<4x128xf32>
    %c0_97 = arith.constant 0 : index
    %c2_98 = arith.constant 2 : index
    %c0_99 = arith.constant 0 : index
    %c0_100 = arith.constant 0 : index
    %116 = vector.load %arg6[%c0_97, %c2_98, %c0_99, %c0_100] : memref<1x4x4x128xf32, #tpu.memory_space<vmem>>, vector<1x1x4x128xf32>
    %117 = vector.shape_cast %116 : vector<1x1x4x128xf32> to vector<4x128xf32>
    %118 = vector.shape_cast %115 : vector<4x128xf32> to vector<1x1x4x128xf32>
    tpu.vector_store %arg6[%c0_97, %c2_98, %c0_99, %c0_100], %118 {strides = array<i32>} : memref<1x4x4x128xf32, #tpu.memory_space<vmem>>, vector<1x1x4x128xf32>,
    %c0_101 = arith.constant 0 : index
    %c3 = arith.constant 3 : index
    %c0_102 = arith.constant 0 : index
    %c0_103 = arith.constant 0 : index
    %119 = vector.load %arg2[%c0_101, %c3, %c0_102, %c0_103] : memref<1x4x4x128xf32, #tpu.memory_space<vmem>>, vector<1x1x4x128xf32>
    %120 = vector.shape_cast %119 : vector<1x1x4x128xf32> to vector<4x128xf32>
    %cst_104 = arith.constant 0.000000e+00 : f32
    %121 = vector.broadcast %cst_104 : f32 to vector<4x128xf32>
    %122 = arith.subf %121, %120 : vector<4x128xf32>
    %123 = math.exp %122 : vector<4x128xf32>
    %cst_105 = arith.constant 1.000000e+00 : f32
    %124 = vector.broadcast %cst_105 : f32 to vector<4x128xf32>
    %125 = arith.addf %124, %123 : vector<4x128xf32>
    %126 = tpu.reciprocal %125 {approx = true} : vector<4x128xf32> -> vector<4x128xf32>
    %c3_i32 = arith.constant 3 : i32
    %127 = vector.broadcast %c3_i32 : i32 to vector<4x128xi32>
    %128 = arith.cmpi eq, %4, %127 : vector<4x128xi32>
    %129 = arith.extui %128 : vector<4x128xi1> to vector<4x128xi32>
    %130 = arith.sitofp %129 : vector<4x128xi32> to vector<4x128xf32>
    %c0_106 = arith.constant 0 : index
    %c3_107 = arith.constant 3 : index
    %c0_108 = arith.constant 0 : index
    %c0_109 = arith.constant 0 : index
    %131 = vector.load %arg4[%c0_106, %c3_107, %c0_108, %c0_109] : memref<1x4x4x128xf32, #tpu.memory_space<vmem>>, vector<1x1x4x128xf32>
    %132 = vector.shape_cast %131 : vector<1x1x4x128xf32> to vector<4x128xf32>
    %133 = arith.mulf %126, %130 : vector<4x128xf32>
    %134 = vector.shape_cast %133 : vector<4x128xf32> to vector<1x4x128xf32>
    %cst_110 = arith.constant dense<0.000000e+00> : vector<4x128xf32>
    %135 = vector.multi_reduction <add>, %134, %cst_110 [0] : vector<1x4x128xf32> to vector<4x128xf32>
    %136 = arith.addf %132, %135 : vector<4x128xf32>
    %c0_111 = arith.constant 0 : index
    %c3_112 = arith.constant 3 : index
    %c0_113 = arith.constant 0 : index
    %c0_114 = arith.constant 0 : index
    %137 = vector.load %arg4[%c0_111, %c3_112, %c0_113, %c0_114] : memref<1x4x4x128xf32, #tpu.memory_space<vmem>>, vector<1x1x4x128xf32>
    %138 = vector.shape_cast %137 : vector<1x1x4x128xf32> to vector<4x128xf32>
    %139 = vector.shape_cast %136 : vector<4x128xf32> to vector<1x1x4x128xf32>
    tpu.vector_store %arg4[%c0_111, %c3_112, %c0_113, %c0_114], %139 {strides = array<i32>} : memref<1x4x4x128xf32, #tpu.memory_space<vmem>>, vector<1x1x4x128xf32>,
    %c0_115 = arith.constant 0 : index
    %c3_116 = arith.constant 3 : index
    %c0_117 = arith.constant 0 : index
    %c0_118 = arith.constant 0 : index
    %140 = vector.load %arg5[%c0_115, %c3_116, %c0_117, %c0_118] : memref<1x4x4x128xf32, #tpu.memory_space<vmem>>, vector<1x1x4x128xf32>
    %141 = vector.shape_cast %140 : vector<1x1x4x128xf32> to vector<4x128xf32>
    %142 = arith.mulf %126, %126 : vector<4x128xf32>
    %143 = vector.shape_cast %142 : vector<4x128xf32> to vector<1x4x128xf32>
    %cst_119 = arith.constant dense<0.000000e+00> : vector<4x128xf32>
    %144 = vector.multi_reduction <add>, %143, %cst_119 [0] : vector<1x4x128xf32> to vector<4x128xf32>
    %145 = arith.addf %141, %144 : vector<4x128xf32>
    %c0_120 = arith.constant 0 : index
    %c3_121 = arith.constant 3 : index
    %c0_122 = arith.constant 0 : index
    %c0_123 = arith.constant 0 : index
    %146 = vector.load %arg5[%c0_120, %c3_121, %c0_122, %c0_123] : memref<1x4x4x128xf32, #tpu.memory_space<vmem>>, vector<1x1x4x128xf32>
    %147 = vector.shape_cast %146 : vector<1x1x4x128xf32> to vector<4x128xf32>
    %148 = vector.shape_cast %145 : vector<4x128xf32> to vector<1x1x4x128xf32>
    tpu.vector_store %arg5[%c0_120, %c3_121, %c0_122, %c0_123], %148 {strides = array<i32>} : memref<1x4x4x128xf32, #tpu.memory_space<vmem>>, vector<1x1x4x128xf32>,
    %c0_124 = arith.constant 0 : index
    %c3_125 = arith.constant 3 : index
    %c0_126 = arith.constant 0 : index
    %c0_127 = arith.constant 0 : index
    %149 = vector.load %arg6[%c0_124, %c3_125, %c0_126, %c0_127] : memref<1x4x4x128xf32, #tpu.memory_space<vmem>>, vector<1x1x4x128xf32>
    %150 = vector.shape_cast %149 : vector<1x1x4x128xf32> to vector<4x128xf32>
    %151 = vector.shape_cast %130 : vector<4x128xf32> to vector<1x4x128xf32>
    %cst_128 = arith.constant dense<0.000000e+00> : vector<4x128xf32>
    %152 = vector.multi_reduction <add>, %151, %cst_128 [0] : vector<1x4x128xf32> to vector<4x128xf32>
    %153 = arith.addf %150, %152 : vector<4x128xf32>
    %c0_129 = arith.constant 0 : index
    %c3_130 = arith.constant 3 : index
    %c0_131 = arith.constant 0 : index
    %c0_132 = arith.constant 0 : index
    %154 = vector.load %arg6[%c0_129, %c3_130, %c0_131, %c0_132] : memref<1x4x4x128xf32, #tpu.memory_space<vmem>>, vector<1x1x4x128xf32>
    %155 = vector.shape_cast %154 : vector<1x1x4x128xf32> to vector<4x128xf32>
    %156 = vector.shape_cast %153 : vector<4x128xf32> to vector<1x1x4x128xf32>
    tpu.vector_store %arg6[%c0_129, %c3_130, %c0_131, %c0_132], %156 {strides = array<i32>} : memref<1x4x4x128xf32, #tpu.memory_space<vmem>>, vector<1x1x4x128xf32>,
    return
  }
  func.func @transform_0(%arg0: i32, %arg1: i32) -> (i32, i32, i32, i32) {
    %c0_i32 = arith.constant 0 : i32
    %c0_i32_0 = arith.constant 0 : i32
    %c0_i32_1 = arith.constant 0 : i32
    return %arg0, %c0_i32, %arg1, %c0_i32_0 : i32, i32, i32, i32
  }
  func.func @transform_1(%arg0: i32, %arg1: i32) -> (i32, i32, i32, i32) {
    %c0_i32 = arith.constant 0 : i32
    %c0_i32_0 = arith.constant 0 : i32
    %c0_i32_1 = arith.constant 0 : i32
    return %arg0, %c0_i32, %arg1, %c0_i32_0 : i32, i32, i32, i32
  }
  func.func @transform_2(%arg0: i32, %arg1: i32) -> (i32, i32, i32, i32) {
    %c0_i32 = arith.constant 0 : i32
    %c0_i32_0 = arith.constant 0 : i32
    %c0_i32_1 = arith.constant 0 : i32
    %c0_i32_2 = arith.constant 0 : i32
    return %arg0, %c0_i32, %c0_i32_0, %c0_i32_1 : i32, i32, i32, i32
  }
  func.func @transform_3(%arg0: i32, %arg1: i32) -> (i32, i32, i32, i32) {
    %c0_i32 = arith.constant 0 : i32
    %c0_i32_0 = arith.constant 0 : i32
    %c0_i32_1 = arith.constant 0 : i32
    %c0_i32_2 = arith.constant 0 : i32
    return %arg0, %c0_i32, %c0_i32_0, %c0_i32_1 : i32, i32, i32, i32
  }
  func.func @transform_4(%arg0: i32, %arg1: i32) -> (i32, i32, i32, i32) {
    %c0_i32 = arith.constant 0 : i32
    %c0_i32_0 = arith.constant 0 : i32
    %c0_i32_1 = arith.constant 0 : i32
    %c0_i32_2 = arith.constant 0 : i32
    return %arg0, %c0_i32, %c0_i32_0, %c0_i32_1 : i32, i32, i32, i32
  }
}

</mosaic_0001>

<llo_original>
// kernel: tpu_custom_call.1
$region0: #{tpu_custom_call.1}
  #allocation0 [shape = 'u32[]', space=smem, size = 0x4, offset = 0x4, fixed_abs, tag = 'smem constant byte address 0x4 - core index']
  #allocation1 [shape = 'u32[144,128]{1,0:T(1,128)}', space=vmem, size = 0x12000, scoped, tag = 'internal scratch']
  %s0 = inlined_call_operand.hbm [shape: f32[2,4,4,128], index: 0, kind: input, shape index: {}]
  %s1 = inlined_call_operand.hbm [shape: s32[2,1,4,128], index: 1, kind: input, shape index: {}]
  %s2 = inlined_call_operand.hbm [shape: f32[2,4,4,128], index: 2, kind: output, shape index: {0}]
  %s3 = inlined_call_operand.hbm [shape: f32[2,4,4,128], index: 3, kind: output, shape index: {1}]
  %s4 = inlined_call_operand.hbm [shape: f32[2,4,4,128], index: 4, kind: output, shape index: {2}]
  %5 = xla_tuple %s2, %s3, %s4
  %s6 = sld [smem:[#allocation0]]
  $region69: #{tpu_custom_call.1} parent=0
    _
  %s8 = ssub.s32 1, %s6
  %s9 = scalar_select 0, %s8, %s6
  $region1: #{tpu_custom_call.1} parent=0
    #allocation2 [shape = 'u8[16384]{0}', space=vmem, size = 0x4000, scoped, tag = 'input window, operand 0']
    #allocation3 [shape = 's32[2]{0}', space=sflag, size = 0x8, scoped, tag = 'scoped memory for tpu_custom_call.1']
    #allocation4 [shape = 's32[2]{0}', space=sflag, size = 0x8, scoped, tag = 'scoped memory for tpu_custom_call.1']
    #allocation5 [shape = 'u8[4096]{0}', space=vmem, size = 0x1000, scoped, tag = 'input window, operand 1']
    #allocation6 [shape = 's32[2]{0}', space=sflag, size = 0x8, scoped, tag = 'scoped memory for tpu_custom_call.1']
    #allocation7 [shape = 'u8[16384]{0}', space=vmem, size = 0x4000, scoped, tag = 'output window, operand 0']
    #allocation8 [shape = 'u8[16384]{0}', space=vmem, size = 0x4000, scoped, tag = 'output window, operand 1']
    #allocation9 [shape = 's32[2]{0}', space=sflag, size = 0x8, scoped, tag = 'scoped memory for tpu_custom_call.1']
    #allocation10 [shape = 'u8[16384]{0}', space=vmem, size = 0x4000, scoped, tag = 'output window, operand 2']
    %10 = vsyncpa [#allocation3], 0
    %s11 = scalar_lea.sflag [#allocation3], 1
    %12 = vsyncpa %s11, 0
    %13 = vsyncpa [#allocation6], 0
    %s14 = scalar_lea.sflag [#allocation6], 1
    %15 = vsyncpa %s14, 0
    %16 = vsyncpa [#allocation4], 0
    %s17 = scalar_lea.sflag [#allocation4], 1
    %18 = vsyncpa %s17, 0
    %19 = vsyncpa [#allocation9], 0
    %s20 = scalar_lea.sflag [#allocation9], 1
    %21 = vsyncpa %s20, 0
    loop: start=0, step=1, limit=4
    $region2: #{tpu_custom_call.1} parent=1 // loop_pre_header
      _
    $region3: #{tpu_custom_call.1} parent=1 // loop_header
      %s23 = sphi 0, %s27
      %p24 = scmp.ge.s32.totalorder %s23, 4
      %s30 = sphi 0, %s42
      %s31 = sphi 0, %s38
      %s32 = sphi 0, %s30
      %s33 = sphi 0, %s31
      %s34 = sphi 0, %s32
      %s35 = sphi 0, %s33
      %s47 = sphi 0, %s49
      %s50 = sphi 0, %s47
      %s51 = sphi 0, %s50
      %s67 = sphi 0, %s51
      %s75 = sphi 0, %s77
      %s78 = sphi 0, %s75
      %s79 = sphi 0, %s78
      %s95 = sphi 0, %s79
      %s101 = sphi 0, %s103
      %s104 = sphi 0, %s101
      %s105 = sphi 0, %s104
      %s121 = sphi 0, %s105
      %s127 = sphi 0, %s129
      %s130 = sphi 0, %s127
      %s131 = sphi 0, %s130
      %s147 = sphi 0, %s131
      %s153 = sphi 0, %s155
      %s156 = sphi 0, %s153
      %s157 = sphi 0, %s156
      %s173 = sphi 0, %s157
    $region4: #{tpu_custom_call.1} parent=1 // loop_header_branch
      %26 = sbr.rel (%p24) target = $region8
    $region5: #{tpu_custom_call.1} parent=1 // loop_body
      %s28 = ssub.s32 %s23, 1
      %s29 = ssub.s32 %s23, 2
      %s36 = sadd.s32 1, %s31
      %p37 = scmp.ge.s32.totalorder %s36, 1
      %s38 = scalar_select %p37, 0, %s36
      %s39 = sadd.s32 1, %s30
      %s40 = scalar_select %p37, %s39, %s30
      %p41 = scmp.ge.s32.totalorder %s40, 2
      %s42 = scalar_select %p41, 0, %s40
      %s43 = ssub.s32 %s30, %s42
      %s44 = ssub.s32 %s31, %s38
      %s45 = sor.u32 %s43, %s44
      %p46 = scmp.eq.s32.totalorder %s45, 0
      %s48 = sadd.s32 %s47, 1
      %s49 = scalar_select %p46, %s47, %s48
      %p52 = pneg %p46
      %p53 = scmp.eq.s32.totalorder %s23, 1
      %p54 = por %p52, %p53
      %p55 = scmp.ne.s32.totalorder %s47, %s50
      %p56 = scmp.eq.s32.totalorder %s23, 0
      %p57 = por %p55, %p56
      %p58 = scmp.ne.s32.totalorder %s47, %s50
      %p59 = scmp.eq.s32.totalorder %s28, 1
      %p60 = por %p58, %p59
      %p61 = scmp.ne.s32.totalorder %s50, %s51
      %p62 = scmp.eq.s32.totalorder %s28, 0
      %p63 = por %p61, %p62
      %p64 = scmp.ne.s32.totalorder %s50, %s51
      %p65 = scmp.eq.s32.totalorder %s29, 1
      %p66 = por %p64, %p65
      %p68 = scmp.ne.s32.totalorder %s51, %s67
      %p69 = scmp.eq.s32.totalorder %s29, 0
      %p70 = por %p68, %p69
      %s71 = ssub.s32 %s30, %s42
      %s72 = ssub.s32 %s31, %s38
      %s73 = sor.u32 %s71, %s72
      %p74 = scmp.eq.s32.totalorder %s73, 0
      %s76 = sadd.s32 %s75, 1
      %s77 = scalar_select %p74, %s75, %s76
      %p80 = pneg %p74
      %p81 = scmp.eq.s32.totalorder %s23, 1
      %p82 = por %p80, %p81
      %p83 = scmp.ne.s32.totalorder %s75, %s78
      %p84 = scmp.eq.s32.totalorder %s23, 0
      %p85 = por %p83, %p84
      %p86 = scmp.ne.s32.totalorder %s75, %s78
      %p87 = scmp.eq.s32.totalorder %s28, 1
      %p88 = por %p86, %p87
      %p89 = scmp.ne.s32.totalorder %s78, %s79
      %p90 = scmp.eq.s32.totalorder %s28, 0
      %p91 = por %p89, %p90
      %p92 = scmp.ne.s32.totalorder %s78, %s79
      %p93 = scmp.eq.s32.totalorder %s29, 1
      %p94 = por %p92, %p93
      %p96 = scmp.ne.s32.totalorder %s79, %s95
      %p97 = scmp.eq.s32.totalorder %s29, 0
      %p98 = por %p96, %p97
      %s99 = ssub.s32 %s30, %s42
      %p100 = scmp.eq.s32.totalorder %s99, 0
      %s102 = sadd.s32 %s101, 1
      %s103 = scalar_select %p100, %s101, %s102
      %p106 = pneg %p100
      %p107 = scmp.eq.s32.totalorder %s23, 1
      %p108 = por %p106, %p107
      %p109 = scmp.ne.s32.totalorder %s101, %s104
      %p110 = scmp.eq.s32.totalorder %s23, 0
      %p111 = por %p109, %p110
      %p112 = scmp.ne.s32.totalorder %s101, %s104
      %p113 = scmp.eq.s32.totalorder %s28, 1
      %p114 = por %p112, %p113
      %p115 = scmp.ne.s32.totalorder %s104, %s105
      %p116 = scmp.eq.s32.totalorder %s28, 0
      %p117 = por %p115, %p116
      %p118 = scmp.ne.s32.totalorder %s104, %s105
      %p119 = scmp.eq.s32.totalorder %s29, 1
      %p120 = por %p118, %p119
      %p122 = scmp.ne.s32.totalorder %s105, %s121
      %p123 = scmp.eq.s32.totalorder %s29, 0
      %p124 = por %p122, %p123
      %s125 = ssub.s32 %s30, %s42
      %p126 = scmp.eq.s32.totalorder %s125, 0
      %s128 = sadd.s32 %s127, 1
      %s129 = scalar_select %p126, %s127, %s128
      %p132 = pneg %p126
      %p133 = scmp.eq.s32.totalorder %s23, 1
      %p134 = por %p132, %p133
      %p135 = scmp.ne.s32.totalorder %s127, %s130
      %p136 = scmp.eq.s32.totalorder %s23, 0
      %p137 = por %p135, %p136
      %p138 = scmp.ne.s32.totalorder %s127, %s130
      %p139 = scmp.eq.s32.totalorder %s28, 1
      %p140 = por %p138, %p139
      %p141 = scmp.ne.s32.totalorder %s130, %s131
      %p142 = scmp.eq.s32.totalorder %s28, 0
      %p143 = por %p141, %p142
      %p144 = scmp.ne.s32.totalorder %s130, %s131
      %p145 = scmp.eq.s32.totalorder %s29, 1
      %p146 = por %p144, %p145
      %p148 = scmp.ne.s32.totalorder %s131, %s147
      %p149 = scmp.eq.s32.totalorder %s29, 0
      %p150 = por %p148, %p149
      %s151 = ssub.s32 %s30, %s42
      %p152 = scmp.eq.s32.totalorder %s151, 0
      %s154 = sadd.s32 %s153, 1
      %s155 = scalar_select %p152, %s153, %s154
      %p158 = pneg %p152
      %p159 = scmp.eq.s32.totalorder %s23, 1
      %p160 = por %p158, %p159
      %p161 = scmp.ne.s32.totalorder %s153, %s156
      %p162 = scmp.eq.s32.totalorder %s23, 0
      %p163 = por %p161, %p162
      %p164 = scmp.ne.s32.totalorder %s153, %s156
      %p165 = scmp.eq.s32.totalorder %s28, 1
      %p166 = por %p164, %p165
      %p167 = scmp.ne.s32.totalorder %s156, %s157
      %p168 = scmp.eq.s32.totalorder %s28, 0
      %p169 = por %p167, %p168
      %p170 = scmp.ne.s32.totalorder %s156, %s157
      %p171 = scmp.eq.s32.totalorder %s29, 1
      %p172 = por %p170, %p171
      %p174 = scmp.ne.s32.totalorder %s157, %s173
      %p175 = scmp.eq.s32.totalorder %s29, 0
      %p176 = por %p174, %p175
      %p177 = scmp.le.s32.totalorder 1, %s23
      %p178 = scmp.lt.s32.totalorder %s23, 3
      %p179 = pnand %p177, %p178
      %p180 = pneg %p179
      // Predicated region
      $region9: #{tpu_custom_call.1} parent=5 // pred_check
        _
      $region10: #{tpu_custom_call.1} parent=5 // pred_check_branch
        %182 = sbr.rel (%p179) target = $region12
      $region11: #{tpu_custom_call.1} parent=5 // pred_region
        %s183 = ssub.s32 %s23, 1
      $region12: #{tpu_custom_call.1} parent=5 // pred_fallthru
        _
      %p184 = scmp.lt.s32.totalorder %s23, 2
      // Predicated region
      $region13: #{tpu_custom_call.1} parent=5 // pred_check
        %p185 = pneg %p184
      $region14: #{tpu_custom_call.1} parent=5 // pred_check_branch
        %187 = sbr.rel (%p185) target = $region16
      $region15: #{tpu_custom_call.1} parent=5 // pred_region
        // Predicated region
        $region17: #{tpu_custom_call.1} parent=15 // pred_check
          %p188 = pneg %p57
        $region18: #{tpu_custom_call.1} parent=15 // pred_check_branch
          %190 = sbr.rel (%p188) target = $region20
        $region19: #{tpu_custom_call.1} parent=15 // pred_region
          %s191 = sand.u32 %s47, 1
          %s192 = scalar_lea.sflag [#allocation3], %s191
          %s193 = sand.u32 %s47, 1
          %s194 = smul.addr %s193, 16
          %s195 = scalar_lea.vmem [#allocation2], %s194
          %s197 = ssub.s32 256, 256
          %198 = vsyncadd %s192, %s197
          %s199 = smul.addr %s30, 4
          %s200 = sadd.s32 %s31, %s199
          %s201 = smul.addr %s200, 64
          %s202 = scalar_lea.hbm %s0, %s201
          %s203 = sshll.u32 %s195, 4
          %s204 = int_to_ptr.vmem [resolvable:$true] %s203
          %209 = dma.hbm_to_vmem [thread:$0]  %s202, 256, %s204, %s192, 64, 64, 4
        $region20: #{tpu_custom_call.1} parent=15 // pred_fallthru
          _
        // Predicated region
        $region21: #{tpu_custom_call.1} parent=15 // pred_check
          %p210 = pneg %p85
        $region22: #{tpu_custom_call.1} parent=15 // pred_check_branch
          %212 = sbr.rel (%p210) target = $region24
        $region23: #{tpu_custom_call.1} parent=15 // pred_region
          %s213 = sand.u32 %s75, 1
          %s214 = scalar_lea.sflag [#allocation6], %s213
          %s215 = sand.u32 %s75, 1
          %s216 = smul.addr %s215, 4
          %s217 = scalar_lea.vmem [#allocation5], %s216
          %s219 = ssub.s32 64, 64
          %220 = vsyncadd %s214, %s219
          %s221 = sadd.s32 %s31, %s30
          %s222 = smul.addr %s221, 64
          %s223 = scalar_lea.hbm %s1, %s222
          %s225 = sshll.u32 %s217, 4
          %s226 = int_to_ptr.vmem [resolvable:$true] %s225
          %228 = dma.hbm_to_vmem [thread:$0]  %s223, 64, %s226, %s214
        $region24: #{tpu_custom_call.1} parent=15 // pred_fallthru
          _
      $region16: #{tpu_custom_call.1} parent=5 // pred_fallthru
        _
      %p229 = scmp.le.s32.totalorder 1, %s23
      %p230 = scmp.lt.s32.totalorder %s23, 3
      %p231 = pnand %p229, %p230
      %p232 = pneg %p231
      // Predicated region
      $region25: #{tpu_custom_call.1} parent=5 // pred_check
        _
      $region26: #{tpu_custom_call.1} parent=5 // pred_check_branch
        %234 = sbr.rel (%p231) target = $region28
      $region27: #{tpu_custom_call.1} parent=5 // pred_region
        %s235 = ssub.s32 %s23, 1
        %s236 = sand.u32 %s50, 1
        %s237 = scalar_lea.sflag [#allocation3], %s236
        %s238 = sand.u32 %s50, 1
        %s239 = smul.addr %s238, 16
        %s240 = scalar_lea.vmem [#allocation2], %s239
        // Predicated region
        $region29: #{tpu_custom_call.1} parent=27 // pred_check
          %p241 = pneg %p63
        $region30: #{tpu_custom_call.1} parent=27 // pred_check_branch
          %243 = sbr.rel (%p241) target = $region32
        $region31: #{tpu_custom_call.1} parent=27 // pred_region
          %244 = dma.done %s237, 256
        $region32: #{tpu_custom_call.1} parent=27 // pred_fallthru
          _
        %s245 = sand.u32 %s78, 1
        %s246 = scalar_lea.sflag [#allocation6], %s245
        %s247 = sand.u32 %s78, 1
        %s248 = smul.addr %s247, 4
        %s249 = scalar_lea.vmem [#allocation5], %s248
        // Predicated region
        $region33: #{tpu_custom_call.1} parent=27 // pred_check
          %p250 = pneg %p91
        $region34: #{tpu_custom_call.1} parent=27 // pred_check_branch
          %252 = sbr.rel (%p250) target = $region36
        $region35: #{tpu_custom_call.1} parent=27 // pred_region
          %253 = dma.done %s246, 64
        $region36: #{tpu_custom_call.1} parent=27 // pred_fallthru
          _
        %s254 = sand.u32 %s50, 1
        %s255 = scalar_lea.sflag [#allocation3], %s254
        %s256 = sand.u32 %s50, 1
        %s257 = smul.addr %s256, 16
        %s258 = scalar_lea.vmem [#allocation2], %s257
        %p259 = pneg %p63
        %p260 = pneg %p60
        %s261 = sand.u32 %s78, 1
        %s262 = scalar_lea.sflag [#allocation6], %s261
        %s263 = sand.u32 %s78, 1
        %s264 = smul.addr %s263, 4
        %s265 = scalar_lea.vmem [#allocation5], %s264
        %p266 = pneg %p91
        %p267 = pneg %p88
        %p268 = pneg %p117
        %p269 = pneg %p114
        %s270 = sand.u32 %s104, 1
        %s271 = scalar_lea.sflag [#allocation4], %s270
        %s272 = sand.u32 %s104, 1
        %s273 = smul.addr %s272, 16
        %s274 = scalar_lea.vmem [#allocation7], %s273
        %p275 = pneg %p143
        %p276 = pneg %p140
        %s277 = sand.u32 %s28, 1
        %s278 = scalar_lea.sflag [#allocation9], %s277
        %s279 = sand.u32 %s130, 1
        %s280 = smul.addr %s279, 16
        %s281 = scalar_lea.vmem [#allocation8], %s280
        %p282 = pneg %p169
        %p283 = pneg %p166
        %s284 = sand.u32 %s28, 1
        %s285 = scalar_lea.sflag [#allocation9], %s284
        %s286 = sand.u32 %s156, 1
        %s287 = smul.addr %s286, 16
        %s288 = scalar_lea.vmem [#allocation10], %s287
        %p289 = scmp.eq.s32.totalorder %s33, 0
        // Predicated region
        $region37: #{tpu_custom_call.1} parent=27 // pred_check
          %p290 = pneg %p289
        $region38: #{tpu_custom_call.1} parent=27 // pred_check_branch
          %292 = sbr.rel (%p290) target = $region40
        $region39: #{tpu_custom_call.1} parent=27 // pred_region
          %293 = vst [vmem:[%s274] sm:$0xf] 0.0
          %294 = vst [vmem:[%s274 + $0x4] sm:$0xf] 0.0
          %295 = vst [vmem:[%s274 + $0x8] sm:$0xf] 0.0
          %296 = vst [vmem:[%s274 + $0xc] sm:$0xf] 0.0
          %297 = vst [vmem:[%s281] sm:$0xf] 0.0
          %298 = vst [vmem:[%s281 + $0x4] sm:$0xf] 0.0
          %299 = vst [vmem:[%s281 + $0x8] sm:$0xf] 0.0
          %300 = vst [vmem:[%s281 + $0xc] sm:$0xf] 0.0
          %301 = vst [vmem:[%s288] sm:$0xf] 0.0
          %302 = vst [vmem:[%s288 + $0x4] sm:$0xf] 0.0
          %303 = vst [vmem:[%s288 + $0x8] sm:$0xf] 0.0
          %304 = vst [vmem:[%s288 + $0xc] sm:$0xf] 0.0
        $region40: #{tpu_custom_call.1} parent=27 // pred_fallthru
          _
        %v305 = vld [vmem:[%s249] sm:$0xf]
        %v306 = vld [vmem:[%s240] sm:$0xf]
        %v307 = vsub.f32 0.0, %v306
        %v308 = vmul.f32 %v307, 1.442695
        %v309 = vpow.pop %v308
        %v310 = vadd.f32 %v309, 1.0
        %v311 = vrcp.pop %v310
        %vm312 = vcmp.eq.s32.totalorder %v305, 0
        %v313 = vsel %vm312, 1, 0
        %v314 = vcvt.s32.f32 %v313
        %v315 = vld [vmem:[%s274] sm:$0xf]
        %v316 = vmul.f32 %v311, %v314
        %v317 = vadd.f32 %v316, 0.0
        %v318 = vadd.f32 %v315, %v317
        %319 = vst [vmem:[%s274] sm:$0xf] %v318
        %v320 = vld [vmem:[%s281] sm:$0xf]
        %v321 = vmul.f32 %v311, %v311
        %v322 = vadd.f32 %v321, 0.0
        %v323 = vadd.f32 %v320, %v322
        %324 = vst [vmem:[%s281] sm:$0xf] %v323
        %v325 = vld [vmem:[%s288] sm:$0xf]
        %v326 = vadd.f32 %v314, 0.0
        %v327 = vadd.f32 %v325, %v326
        %328 = vst [vmem:[%s288] sm:$0xf] %v327
        %s329 = scalar_lea.vmem %s240, 4 [#allocation2]
        %v330 = vld [vmem:[%s329] sm:$0xf]
        %v331 = vsub.f32 0.0, %v330
        %v332 = vmul.f32 %v331, 1.442695
        %v333 = vpow.pop %v332
        %v334 = vadd.f32 %v333, 1.0
        %v335 = vrcp.pop %v334
        %vm336 = vcmp.eq.s32.totalorder %v305, 1
        %v337 = vsel %vm336, 1, 0
        %v338 = vcvt.s32.f32 %v337
        %s339 = scalar_lea.vmem %s274, 4 [#allocation7]
        %v340 = vld [vmem:[%s339] sm:$0xf]
        %v341 = vmul.f32 %v335, %v338
        %v342 = vadd.f32 %v341, 0.0
        %v343 = vadd.f32 %v340, %v342
        %344 = vst [vmem:[%s339] sm:$0xf] %v343
        %s345 = scalar_lea.vmem %s281, 4 [#allocation8]
        %v346 = vld [vmem:[%s345] sm:$0xf]
        %v347 = vmul.f32 %v335, %v335
        %v348 = vadd.f32 %v347, 0.0
        %v349 = vadd.f32 %v346, %v348
        %350 = vst [vmem:[%s345] sm:$0xf] %v349
        %s351 = scalar_lea.vmem %s288, 4 [#allocation10]
        %v352 = vld [vmem:[%s351] sm:$0xf]
        %v353 = vadd.f32 %v338, 0.0
        %v354 = vadd.f32 %v352, %v353
        %355 = vst [vmem:[%s351] sm:$0xf] %v354
        %s356 = scalar_lea.vmem %s240, 8 [#allocation2]
        %v357 = vld [vmem:[%s356] sm:$0xf]
        %v358 = vsub.f32 0.0, %v357
        %v359 = vmul.f32 %v358, 1.442695
        %v360 = vpow.pop %v359
        %v361 = vadd.f32 %v360, 1.0
        %v362 = vrcp.pop %v361
        %vm363 = vcmp.eq.s32.totalorder %v305, 2
        %v364 = vsel %vm363, 1, 0
        %v365 = vcvt.s32.f32 %v364
        %s366 = scalar_lea.vmem %s274, 8 [#allocation7]
        %v367 = vld [vmem:[%s366] sm:$0xf]
        %v368 = vmul.f32 %v362, %v365
        %v369 = vadd.f32 %v368, 0.0
        %v370 = vadd.f32 %v367, %v369
        %371 = vst [vmem:[%s366] sm:$0xf] %v370
        %s372 = scalar_lea.vmem %s281, 8 [#allocation8]
        %v373 = vld [vmem:[%s372] sm:$0xf]
        %v374 = vmul.f32 %v362, %v362
        %v375 = vadd.f32 %v374, 0.0
        %v376 = vadd.f32 %v373, %v375
        %377 = vst [vmem:[%s372] sm:$0xf] %v376
        %s378 = scalar_lea.vmem %s288, 8 [#allocation10]
        %v379 = vld [vmem:[%s378] sm:$0xf]
        %v380 = vadd.f32 %v365, 0.0
        %v381 = vadd.f32 %v379, %v380
        %382 = vst [vmem:[%s378] sm:$0xf] %v381
        %s383 = scalar_lea.vmem %s240, 12 [#allocation2]
        %v384 = vld [vmem:[%s383] sm:$0xf]
        %v385 = vsub.f32 0.0, %v384
        %v386 = vmul.f32 %v385, 1.442695
        %v387 = vpow.pop %v386
        %v388 = vadd.f32 %v387, 1.0
        %v389 = vrcp.pop %v388
        %vm390 = vcmp.eq.s32.totalorder %v305, 3
        %v391 = vsel %vm390, 1, 0
        %v392 = vcvt.s32.f32 %v391
        %s393 = scalar_lea.vmem %s274, 12 [#allocation7]
        %v394 = vld [vmem:[%s393] sm:$0xf]
        %v395 = vmul.f32 %v389, %v392
        %v396 = vadd.f32 %v395, 0.0
        %v397 = vadd.f32 %v394, %v396
        %398 = vst [vmem:[%s393] sm:$0xf] %v397
        %s399 = scalar_lea.vmem %s281, 12 [#allocation8]
        %v400 = vld [vmem:[%s399] sm:$0xf]
        %v401 = vmul.f32 %v389, %v389
        %v402 = vadd.f32 %v401, 0.0
        %v403 = vadd.f32 %v400, %v402
        %404 = vst [vmem:[%s399] sm:$0xf] %v403
        %s405 = scalar_lea.vmem %s288, 12 [#allocation10]
        %v406 = vld [vmem:[%s405] sm:$0xf]
        %v407 = vadd.f32 %v392, 0.0
        %v408 = vadd.f32 %v406, %v407
        %409 = vst [vmem:[%s405] sm:$0xf] %v408
        %s410 = sand.u32 %s104, 1
        %s411 = scalar_lea.sflag [#allocation4], %s410
        %s412 = sand.u32 %s104, 1
        %s413 = smul.addr %s412, 16
        %s414 = scalar_lea.vmem [#allocation7], %s413
        %s415 = sand.u32 %s28, 1
        %s416 = scalar_lea.sflag [#allocation9], %s415
        %s417 = sand.u32 %s130, 1
        %s418 = smul.addr %s417, 16
        %s419 = scalar_lea.vmem [#allocation8], %s418
        %s420 = sand.u32 %s28, 1
        %s421 = scalar_lea.sflag [#allocation9], %s420
        %s422 = sand.u32 %s156, 1
        %s423 = smul.addr %s422, 16
        %s424 = scalar_lea.vmem [#allocation10], %s423
        // Predicated region
        $region41: #{tpu_custom_call.1} parent=27 // pred_check
          %p425 = pneg %p114
        $region42: #{tpu_custom_call.1} parent=27 // pred_check_branch
          %427 = sbr.rel (%p425) target = $region44
        $region43: #{tpu_custom_call.1} parent=27 // pred_region
          %s429 = ssub.s32 256, 256
          %430 = vsyncadd %s411, %s429
          %s431 = smul.addr %s32, 4
          %s432 = smul.addr %s431, 64
          %s433 = scalar_lea.hbm %s2, %s432
          %s434 = sshll.u32 %s414, 4
          %s435 = int_to_ptr.vmem [resolvable:$true] %s434
          %440 = dma.vmem_to_hbm [thread:$0]  %s435, 256, %s433, %s411, 64, 64, 4
        $region44: #{tpu_custom_call.1} parent=27 // pred_fallthru
          _
        // Predicated region
        $region45: #{tpu_custom_call.1} parent=27 // pred_check
          %p441 = pneg %p140
        $region46: #{tpu_custom_call.1} parent=27 // pred_check_branch
          %443 = sbr.rel (%p441) target = $region48
        $region47: #{tpu_custom_call.1} parent=27 // pred_region
          %s445 = ssub.s32 256, 256
          %446 = vsyncadd %s416, %s445
          %s447 = smul.addr %s32, 4
          %s448 = smul.addr %s447, 64
          %s449 = scalar_lea.hbm %s3, %s448
          %s450 = sshll.u32 %s419, 4
          %s451 = int_to_ptr.vmem [resolvable:$true] %s450
          %456 = dma.vmem_to_hbm [thread:$0]  %s451, 256, %s449, %s416, 64, 64, 4
        $region48: #{tpu_custom_call.1} parent=27 // pred_fallthru
          _
        // Predicated region
        $region49: #{tpu_custom_call.1} parent=27 // pred_check
          %p457 = pneg %p166
        $region50: #{tpu_custom_call.1} parent=27 // pred_check_branch
          %459 = sbr.rel (%p457) target = $region52
        $region51: #{tpu_custom_call.1} parent=27 // pred_region
          %s461 = ssub.s32 256, 256
          %462 = vsyncadd %s421, %s461
          %s463 = smul.addr %s32, 4
          %s464 = smul.addr %s463, 64
          %s465 = scalar_lea.hbm %s4, %s464
          %s466 = sshll.u32 %s424, 4
          %s467 = int_to_ptr.vmem [resolvable:$true] %s466
          %472 = dma.vmem_to_hbm [thread:$0]  %s467, 256, %s465, %s421, 64, 64, 4
        $region52: #{tpu_custom_call.1} parent=27 // pred_fallthru
          _
      $region28: #{tpu_custom_call.1} parent=5 // pred_fallthru
        _
      %p473 = scmp.le.s32.totalorder 2, %s23
      // Predicated region
      $region53: #{tpu_custom_call.1} parent=5 // pred_check
        %p474 = pneg %p473
      $region54: #{tpu_custom_call.1} parent=5 // pred_check_branch
        %476 = sbr.rel (%p474) target = $region56
      $region55: #{tpu_custom_call.1} parent=5 // pred_region
        %s477 = ssub.s32 %s23, 2
        // Predicated region
        $region57: #{tpu_custom_call.1} parent=55 // pred_check
          %p478 = pneg %p120
        $region58: #{tpu_custom_call.1} parent=55 // pred_check_branch
          %480 = sbr.rel (%p478) target = $region60
        $region59: #{tpu_custom_call.1} parent=55 // pred_region
          %s481 = sand.u32 %s105, 1
          %s482 = scalar_lea.sflag [#allocation4], %s481
          %s483 = sand.u32 %s105, 1
          %s484 = smul.addr %s483, 16
          %s485 = scalar_lea.vmem [#allocation7], %s484
          %486 = dma.done %s482, 256
        $region60: #{tpu_custom_call.1} parent=55 // pred_fallthru
          _
        // Predicated region
        $region61: #{tpu_custom_call.1} parent=55 // pred_check
          %p487 = pneg %p146
        $region62: #{tpu_custom_call.1} parent=55 // pred_check_branch
          %489 = sbr.rel (%p487) target = $region64
        $region63: #{tpu_custom_call.1} parent=55 // pred_region
          %s490 = sand.u32 %s29, 1
          %s491 = scalar_lea.sflag [#allocation9], %s490
          %s492 = sand.u32 %s131, 1
          %s493 = smul.addr %s492, 16
          %s494 = scalar_lea.vmem [#allocation8], %s493
          %495 = dma.done %s491, 256
        $region64: #{tpu_custom_call.1} parent=55 // pred_fallthru
          _
        // Predicated region
        $region65: #{tpu_custom_call.1} parent=55 // pred_check
          %p496 = pneg %p172
        $region66: #{tpu_custom_call.1} parent=55 // pred_check_branch
          %498 = sbr.rel (%p496) target = $region68
        $region67: #{tpu_custom_call.1} parent=55 // pred_region
          %s499 = sand.u32 %s29, 1
          %s500 = scalar_lea.sflag [#allocation9], %s499
          %s501 = sand.u32 %s157, 1
          %s502 = smul.addr %s501, 16
          %s503 = scalar_lea.vmem [#allocation10], %s502
          %504 = dma.done %s500, 256
        $region68: #{tpu_custom_call.1} parent=55 // pred_fallthru
          _
      $region56: #{tpu_custom_call.1} parent=5 // pred_fallthru
        _
    $region6: #{tpu_custom_call.1} parent=1 // loop_footer
      %s27 = sadd.s32 1, %s23
    $region7: #{tpu_custom_call.1} parent=1 // loop_footer_branch
      %22 = sbr.rel target = $region3
    $region8: #{tpu_custom_call.1} parent=1 // loop_exit
      _
    %505 = vsyncpa [#allocation3], 1
    %s506 = scalar_lea.sflag [#allocation3], 1
    %507 = vsyncpa %s506, 1
    %508 = vsyncpa [#allocation6], 1
    %s509 = scalar_lea.sflag [#allocation6], 1
    %510 = vsyncpa %s509, 1
    %511 = vsyncpa [#allocation4], 1
    %s512 = scalar_lea.sflag [#allocation4], 1
    %513 = vsyncpa %s512, 1
    %514 = vsyncpa [#allocation9], 1
    %s515 = scalar_lea.sflag [#allocation9], 1
    %516 = vsyncpa %s515, 1

</llo_original>
